<compile_context>
chip_gen: v7x
topology: tpu7x:2x2x1
jax: 0.10.0
libtpu: 0.0.40
codegen_flags: <defaults>
</compile_context>

<pallas_src>
import jax
import jax.numpy as jnp
from jax.experimental import pallas as pl
from jax.experimental.pallas import tpu as pltpu


_LANE = 128
_VMEM_WORKING_BUDGET = 20 * 1024 * 1024   # conservative working set (fits v7x scoped VMEM)
_VMEM_LIMIT_BYTES = 32 * 1024 * 1024      # explicit scoped-VMEM limit for the call


def _cdiv(a, b):
    return -(-a // b)


def _round_up(x, m):
    return _cdiv(x, m) * m


def _pick_tile(dim, target, multiple):
    """Tile size (multiple of `multiple`) near `target` that splits `dim` into
    near-equal chunks, bounding padding waste (instead of rounding dim up to the cap)."""
    if dim <= target:
        return _round_up(dim, multiple)
    chunks = _cdiv(dim, target)
    return _round_up(_cdiv(dim, chunks), multiple)


def _sublane_multiple(dtype):
    # Sublane packing: f32 -> 8 rows / vreg, bf16 -> 16, fp8/int8 -> 32.
    return max(8, 32 // jnp.dtype(dtype).itemsize)


def _vmem_bytes(tm, tn, tk, in_itemsize, out_itemsize, use_acc):
    # Double-buffered pipelined inputs/outputs + optional resident f32 accumulator.
    x_b = 2 * tm * tk * in_itemsize
    w_b = 2 * tk * tn * in_itemsize
    b_b = 2 * tn * 4
    o_b = 2 * tm * tn * out_itemsize
    a_b = tm * tn * 4 if use_acc else 0
    return x_b + w_b + b_b + o_b + a_b


# ----------------------------------------------------------------------------
# Kernels
# ----------------------------------------------------------------------------

def _fp_kernel_inplace(x_ref, w_ref, b_ref, o_ref):
    """ReLU(x @ W + b); accumulates directly in the resident f32 output block."""
    k = pl.program_id(2)
    part = jnp.dot(x_ref[...], w_ref[...], preferred_element_type=jnp.float32)

    @pl.when(k == 0)
    def _():
        o_ref[...] = b_ref[...] + part          # bias folded into the init

    @pl.when(k > 0)
    def _():
        o_ref[...] += part

    @pl.when(k == pl.num_programs(2) - 1)
    def _():
        o_ref[...] = jnp.maximum(o_ref[...], 0.0)


def _fp_kernel_acc(x_ref, w_ref, b_ref, o_ref, acc_ref):
    """Same math but with an f32 scratch accumulator (non-f32 output dtypes)."""
    k = pl.program_id(2)
    part = jnp.dot(x_ref[...], w_ref[...], preferred_element_type=jnp.float32)

    @pl.when(k == 0)
    def _():
        acc_ref[...] = b_ref[...] + part

    @pl.when(k > 0)
    def _():
        acc_ref[...] += part

    @pl.when(k == pl.num_programs(2) - 1)
    def _():
        o_ref[...] = jnp.maximum(acc_ref[...], 0.0).astype(o_ref.dtype)


# ----------------------------------------------------------------------------
# One-time parameter preparation (hoisted out of the hot path)
# ----------------------------------------------------------------------------

def prepare_feature_projector_params(weight, bias, *, compute_dtype=jnp.bfloat16):
    """Transpose / cast / pad the Linear parameters once.

    weight: [output_dim, input_dim]  (PyTorch nn.Linear layout)
    bias:   [output_dim]
    """
    N, K = weight.shape
    assert bias.shape == (N,)
    in_itemsize = jnp.dtype(compute_dtype).itemsize

    # Grow N/K tiles toward full residency (x and W then stream from HBM once).
    n_target = 4096 // in_itemsize          # 1024 cols f32 / 2048 bf16
    k_target = 8192 // in_itemsize          # 2048 rows f32 / 4096 bf16
    tile_n = _pick_tile(N, n_target, _LANE)
    tile_k = _pick_tile(K, k_target, _LANE)

    # Shrink until the worst-case working set (tm=512) fits the VMEM budget.
    while (_vmem_bytes(512, tile_n, tile_k, in_itemsize, 4, True)
           > _VMEM_WORKING_BUDGET):
        if tile_k > 512:
            tile_k = _round_up(tile_k // 2, _LANE)
        elif tile_n > _LANE:
            tile_n = _round_up(tile_n // 2, _LANE)
        else:
            break

    Np = _round_up(N, tile_n)
    Kp = _round_up(K, tile_k)

    w_kn = jnp.asarray(weight).T.astype(compute_dtype)            # [K, N]
    w_p = jnp.pad(w_kn, ((0, Kp - K), (0, Np - N)))
    b_p = jnp.pad(jnp.asarray(bias).astype(jnp.float32),
                  (0, Np - N)).reshape(1, Np)

    return dict(w=w_p, b=b_p, K=K, N=N, Kp=Kp, Np=Np,
                tile_n=tile_n, tile_k=tile_k, compute_dtype=compute_dtype)


# ----------------------------------------------------------------------------
# Per-call apply
# ----------------------------------------------------------------------------

def feature_projector_apply(params, x, *, out_dtype=jnp.float32, tile_m=None):
    """ReLU(x @ W.T + b) using pre-prepared parameters. x: [..., input_dim]."""
    compute_dtype = params["compute_dtype"]
    K, N, Kp, Np = params["K"], params["N"], params["Kp"], params["Np"]
    tile_n, tile_k = params["tile_n"], params["tile_k"]
    assert x.shape[-1] == K

    lead_shape = x.shape[:-1]
    x2 = x.reshape(-1, K).astype(compute_dtype)
    M = x2.shape[0]

    in_itemsize = jnp.dtype(compute_dtype).itemsize
    out_itemsize = jnp.dtype(out_dtype).itemsize
    m_mult = _sublane_multiple(compute_dtype)
    use_acc = jnp.dtype(out_dtype) != jnp.dtype(jnp.float32)

    if tile_m is None:
        tile_m = _pick_tile(M, 512, m_mult)
        while (tile_m > m_mult and
               _vmem_bytes(tile_m, tile_n, tile_k, in_itemsize, out_itemsize,
                           use_acc) > _VMEM_WORKING_BUDGET):
            tile_m = _round_up(tile_m // 2, m_mult)

    Mp = _round_up(M, tile_m)
    if (Mp, Kp) != (M, K):
        x2 = jnp.pad(x2, ((0, Mp - M), (0, Kp - K)))

    grid = (Mp // tile_m, Np // tile_n, Kp // tile_k)

    # NOTE: for decode-style tiny M with many K steps, pipeline_mode=pl.Buffered(3)
    # on the x/W specs can hide the exposed W DMA; left at the default depth here.
    in_specs = [
        pl.BlockSpec((tile_m, tile_k), lambda i, j, k: (i, k)),   # x tile
        pl.BlockSpec((tile_k, tile_n), lambda i, j, k: (k, j)),   # W tile
        pl.BlockSpec((1, tile_n), lambda i, j, k: (0, j)),        # bias slice
    ]
    out_spec = pl.BlockSpec((tile_m, tile_n), lambda i, j, k: (i, j))

    kernel = _fp_kernel_acc if use_acc else _fp_kernel_inplace
    scratch = [pltpu.VMEM((tile_m, tile_n), jnp.float32)] if use_acc else []

    cost = pl.CostEstimate(
        flops=2 * Mp * Np * Kp,
        transcendentals=0,
        bytes_accessed=(Mp * Kp * in_itemsize * grid[1]      # x re-read per N tile
                        + Kp * Np * in_itemsize * grid[0]    # W re-read per M tile
                        + Np * 4
                        + Mp * Np * out_itemsize),
    )

    out = pl.pallas_call(
        kernel,
        out_shape=jax.ShapeDtypeStruct((Mp, Np), out_dtype),
        grid_spec=pltpu.PrefetchScalarGridSpec(
            num_scalar_prefetch=0,
            grid=grid,
            in_specs=in_specs,
            out_specs=out_spec,
            scratch_shapes=scratch,
        ),
        compiler_params=pltpu.CompilerParams(
            # M/N tiles are independent -> megacore-shardable; K (reduction,
            # resident output/accumulator) stays last and "arbitrary".
            dimension_semantics=("parallel", "parallel", "arbitrary"),
            vmem_limit_bytes=_VMEM_LIMIT_BYTES,
        ),
        cost_estimate=cost,
    )(x2, params["w"], params["b"])

    if (Mp, Np) != (M, N):
        out = out[:M, :N]
    return out.reshape(*lead_shape, N)


# ----------------------------------------------------------------------------
# Module-like wrapper mirroring the PyTorch FeatureProjector
# ----------------------------------------------------------------------------

class FeatureProjector:
    """Pallas equivalent of nn.Sequential(nn.Linear(input_dim, output_dim), nn.ReLU())."""

    def __init__(self, input_dim, output_dim=128, *, key=None,
                 compute_dtype=jnp.bfloat16):
        if key is None:
            key = jax.random.PRNGKey(0)
        kw, kb = jax.random.split(key)
        bound = 1.0 / (input_dim ** 0.5)          # nn.Linear default init range
        self.weight = jax.random.uniform(kw, (output_dim, input_dim),
                                         minval=-bound, maxval=bound,
                                         dtype=jnp.float32)
        self.bias = jax.random.uniform(kb, (output_dim,),
                                       minval=-bound, maxval=bound,
                                       dtype=jnp.float32)
        # One-time weight prep (transpose / cast / pad) — not in the hot path.
        self.params = prepare_feature_projector_params(
            self.weight, self.bias, compute_dtype=compute_dtype)

    def __call__(self, x, *, out_dtype=jnp.float32):
        return feature_projector_apply(self.params, x, out_dtype=out_dtype)


if __name__ == "__main__":
    key = jax.random.PRNGKey(0)
    k_x, k_mod, k_x2, k_mod2 = jax.random.split(key, 4)

    batch, input_dim, output_dim = 8, 32, 128
    x = jax.random.normal(k_x, (batch, input_dim), dtype=jnp.float32)

    # Default path: bf16 compute (f32 accumulation / f32 output).
    proj = FeatureProjector(input_dim, output_dim, key=k_mod)
    y = jax.block_until_ready(proj(x))
    y_ref = jnp.maximum(x @ proj.weight.T + proj.bias[None, :], 0.0)
    assert y.shape == (batch, output_dim)
    assert jnp.allclose(y, y_ref, atol=5e-2, rtol=5e-2), \
        float(jnp.max(jnp.abs(y - y_ref)))

    # f32 compute path: matches the reference tightly.
    proj32 = FeatureProjector(input_dim, output_dim, key=k_mod,
                              compute_dtype=jnp.float32)
    y32 = jax.block_until_ready(proj32(x))
    assert jnp.allclose(y32, y_ref, atol=1e-5, rtol=1e-5)

    # Non-divisible M / K / N exercises padding + divisor-style tile rounding.
    x2 = jax.random.normal(k_x2, (10, 40), dtype=jnp.float32)
    proj_odd = FeatureProjector(40, 200, key=k_mod2, compute_dtype=jnp.float32)
    y2 = jax.block_until_ready(proj_odd(x2))
    y2_ref = jnp.maximum(x2 @ proj_odd.weight.T + proj_odd.bias[None, :], 0.0)
    assert jnp.allclose(y2, y2_ref, atol=1e-4, rtol=1e-4)

    print("KERNEL_OK")
</pallas_src>

<mosaic_0001>
module attributes {stable_mosaic.version = 11 : i64} {
  func.func @_fp_kernel_inplace(%arg0: i32, %arg1: i32, %arg2: i32, %arg3: memref<16x128xbf16, #tpu.memory_space<vmem>>, %arg4: memref<128x128xbf16, #tpu.memory_space<vmem>>, %arg5: memref<1x128xf32, #tpu.memory_space<vmem>>, %arg6: memref<16x128xf32, #tpu.memory_space<vmem>>) attributes {dimension_semantics = [#tpu.dimension_semantics<parallel>, #tpu.dimension_semantics<parallel>, #tpu.dimension_semantics<arbitrary>], iteration_bounds = array<i64: 1, 1, 1>, scalar_prefetch = 0 : i64, scratch_operands = 0 : i64, tpu.core_type = #tpu.core_type<tc>, window_params = [{transform_indices = @transform_0, window_bounds = array<i64: 16, 128>}, {transform_indices = @transform_1, window_bounds = array<i64: 128, 128>}, {transform_indices = @transform_2, window_bounds = array<i64: 1, 128>}, {transform_indices = @transform_3, window_bounds = array<i64: 16, 128>}]} {
    %c0 = arith.constant 0 : index
    %c0_0 = arith.constant 0 : index
    %0 = vector.load %arg3[%c0, %c0_0] : memref<16x128xbf16, #tpu.memory_space<vmem>>, vector<16x128xbf16>
    %c0_1 = arith.constant 0 : index
    %c0_2 = arith.constant 0 : index
    %1 = vector.load %arg4[%c0_1, %c0_2] : memref<128x128xbf16, #tpu.memory_space<vmem>>, vector<128x128xbf16>
    %cst = arith.constant dense<0.000000e+00> : vector<16x128xf32>
    %2 = tpu.matmul %0, %1, %cst {dimension_numbers = #tpu.dot_dimension_numbers<[1], [0], [0], [1], [0, 0, 1, 1], [], []>} : vector<16x128xbf16>, vector<128x128xbf16>, vector<16x128xf32> -> vector<16x128xf32>
    %c0_i32 = arith.constant 0 : i32
    %3 = arith.cmpi eq, %arg2, %c0_i32 : i32
    %4 = arith.extui %3 : i1 to i32
    %c0_i32_3 = arith.constant 0 : i32
    %5 = arith.cmpi ne, %4, %c0_i32_3 : i32
    scf.if %5 {
      %c0_8 = arith.constant 0 : index
      %c0_9 = arith.constant 0 : index
      %12 = vector.load %arg5[%c0_8, %c0_9] : memref<1x128xf32, #tpu.memory_space<vmem>>, vector<1x128xf32>
      %13 = vector.broadcast %12 : vector<1x128xf32> to vector<16x128xf32>
      %14 = arith.addf %13, %2 : vector<16x128xf32>
      %c0_10 = arith.constant 0 : index
      %c0_11 = arith.constant 0 : index
      %15 = vector.load %arg6[%c0_10, %c0_11] : memref<16x128xf32, #tpu.memory_space<vmem>>, vector<16x128xf32>
      tpu.vector_store %arg6[%c0_10, %c0_11], %14 {strides = array<i32>} : memref<16x128xf32, #tpu.memory_space<vmem>>, vector<16x128xf32>,
    } else {
    }
    %c0_i32_4 = arith.constant 0 : i32
    %6 = arith.cmpi sgt, %arg2, %c0_i32_4 : i32
    %7 = arith.extui %6 : i1 to i32
    %c0_i32_5 = arith.constant 0 : i32
    %8 = arith.cmpi ne, %7, %c0_i32_5 : i32
    scf.if %8 {
      %c0_8 = arith.constant 0 : index
      %c0_9 = arith.constant 0 : index
      %12 = vector.load %arg6[%c0_8, %c0_9] : memref<16x128xf32, #tpu.memory_space<vmem>>, vector<16x128xf32>
      %13 = arith.addf %12, %2 : vector<16x128xf32>
      %c0_10 = arith.constant 0 : index
      %c0_11 = arith.constant 0 : index
      %14 = vector.load %arg6[%c0_10, %c0_11] : memref<16x128xf32, #tpu.memory_space<vmem>>, vector<16x128xf32>
      tpu.vector_store %arg6[%c0_10, %c0_11], %13 {strides = array<i32>} : memref<16x128xf32, #tpu.memory_space<vmem>>, vector<16x128xf32>,
    } else {
    }
    %c0_i32_6 = arith.constant 0 : i32
    %9 = arith.cmpi eq, %arg2, %c0_i32_6 : i32
    %10 = arith.extui %9 : i1 to i32
    %c0_i32_7 = arith.constant 0 : i32
    %11 = arith.cmpi ne, %10, %c0_i32_7 : i32
    scf.if %11 {
      %c0_8 = arith.constant 0 : index
      %c0_9 = arith.constant 0 : index
      %12 = vector.load %arg6[%c0_8, %c0_9] : memref<16x128xf32, #tpu.memory_space<vmem>>, vector<16x128xf32>
      %cst_10 = arith.constant 0.000000e+00 : f32
      %13 = vector.broadcast %cst_10 : f32 to vector<16x128xf32>
      %14 = arith.maximumf %12, %13 : vector<16x128xf32>
      %c0_11 = arith.constant 0 : index
      %c0_12 = arith.constant 0 : index
      %15 = vector.load %arg6[%c0_11, %c0_12] : memref<16x128xf32, #tpu.memory_space<vmem>>, vector<16x128xf32>
      tpu.vector_store %arg6[%c0_11, %c0_12], %14 {strides = array<i32>} : memref<16x128xf32, #tpu.memory_space<vmem>>, vector<16x128xf32>,
    } else {
    }
    return
  }
  func.func @transform_0(%arg0: i32, %arg1: i32, %arg2: i32) -> (i32, i32) {
    %c0_i32 = arith.constant 0 : i32
    return %arg0, %arg2 : i32, i32
  }
  func.func @transform_1(%arg0: i32, %arg1: i32, %arg2: i32) -> (i32, i32) {
    %c0_i32 = arith.constant 0 : i32
    return %arg2, %arg1 : i32, i32
  }
  func.func @transform_2(%arg0: i32, %arg1: i32, %arg2: i32) -> (i32, i32) {
    %c0_i32 = arith.constant 0 : i32
    %c0_i32_0 = arith.constant 0 : i32
    return %c0_i32, %arg1 : i32, i32
  }
  func.func @transform_3(%arg0: i32, %arg1: i32, %arg2: i32) -> (i32, i32) {
    %c0_i32 = arith.constant 0 : i32
    return %arg0, %arg1 : i32, i32
  }
}

</mosaic_0001>

<llo_original>
// kernel: tpu_custom_call.1
$region0: #{tpu_custom_call.1}
  #allocation0 [shape = 'u32[]', space=smem, size = 0x4, offset = 0x4, fixed_abs, tag = 'smem constant byte address 0x4 - core index']
  #allocation1 [shape = 'u32[144,128]{1,0:T(1,128)}', space=vmem, size = 0x12000, scoped, tag = 'internal scratch']
  %s0 = inlined_call_operand.hbm [shape: bf16[16,128], index: 0, kind: input, shape index: {}]
  %s1 = inlined_call_operand.hbm [shape: bf16[128,128], index: 1, kind: input, shape index: {}]
  %s2 = inlined_call_operand.vmem [shape: f32[1,128], index: 2, kind: input, shape index: {}]
  %s3 = inlined_call_operand.hbm [shape: f32[16,128], index: 3, kind: output, shape index: {}]
  %s4 = sld [smem:[#allocation0]]
  $region42: #{tpu_custom_call.1} parent=0
    _
  %s6 = ssub.s32 1, %s4
  %s7 = scalar_select 0, %s6, %s4
  $region1: #{tpu_custom_call.1} parent=0
    #allocation2 [shape = 'u8[4096]{0}', space=vmem, size = 0x1000, scoped, tag = 'input window, operand 0, single buffered']
    #allocation3 [shape = 's32[1]{0}', space=sflag, size = 0x4, scoped, tag = 'scoped memory for tpu_custom_call.1']
    #allocation4 [shape = 's32[1]{0}', space=sflag, size = 0x4, scoped, tag = 'scoped memory for tpu_custom_call.1']
    #allocation5 [shape = 'u8[32768]{0}', space=vmem, size = 0x8000, scoped, tag = 'input window, operand 1, single buffered']
    #allocation6 [shape = 's32[1]{0}', space=sflag, size = 0x4, scoped, tag = 'scoped memory for tpu_custom_call.1']
    #allocation7 [shape = 'u8[8192]{0}', space=vmem, size = 0x2000, scoped, tag = 'output window, operand 0, single buffered']
    %8 = vsyncpa [#allocation3], 0
    %9 = vsyncpa [#allocation6], 0
    %10 = vsyncpa [#allocation4], 0
    // Predicated region
    $region2: #{tpu_custom_call.1} parent=1 // pred_check
      _
    $region3: #{tpu_custom_call.1} parent=1 // pred_check_branch
      %12 = sbr.rel (0) target = $region5
    $region4: #{tpu_custom_call.1} parent=1 // pred_region
      %s14 = ssub.s32 128, 128
      %15 = vsyncadd [#allocation3], %s14
      %s16 = sshll.u32 [#allocation2], 4
      %s17 = int_to_ptr.vmem [resolvable:$true] %s16
      %22 = dma.hbm_to_vmem [thread:$0]  %s0, 128, %s17, [#allocation3], 64, 64, 4
    $region5: #{tpu_custom_call.1} parent=1 // pred_fallthru
      _
    // Predicated region
    $region6: #{tpu_custom_call.1} parent=1 // pred_check
      _
    $region7: #{tpu_custom_call.1} parent=1 // pred_check_branch
      %24 = sbr.rel (0) target = $region9
    $region8: #{tpu_custom_call.1} parent=1 // pred_region
      %s26 = ssub.s32 1024, 1024
      %27 = vsyncadd [#allocation6], %s26
      %s28 = sshll.u32 [#allocation5], 4
      %s29 = int_to_ptr.vmem [resolvable:$true] %s28
      %34 = dma.hbm_to_vmem [thread:$0]  %s1, 1024, %s29, [#allocation6], 64, 64, 4
    $region9: #{tpu_custom_call.1} parent=1 // pred_fallthru
      _
    // Predicated region
    $region10: #{tpu_custom_call.1} parent=1 // pred_check
      _
    $region11: #{tpu_custom_call.1} parent=1 // pred_check_branch
      %36 = sbr.rel (0) target = $region13
    $region12: #{tpu_custom_call.1} parent=1 // pred_region
      _
    $region13: #{tpu_custom_call.1} parent=1 // pred_fallthru
      _
    // Predicated region
    $region14: #{tpu_custom_call.1} parent=1 // pred_check
      _
    $region15: #{tpu_custom_call.1} parent=1 // pred_check_branch
      %38 = sbr.rel (0) target = $region17
    $region16: #{tpu_custom_call.1} parent=1 // pred_region
      %39 = dma.done [#allocation3], 128
    $region17: #{tpu_custom_call.1} parent=1 // pred_fallthru
      _
    // Predicated region
    $region18: #{tpu_custom_call.1} parent=1 // pred_check
      _
    $region19: #{tpu_custom_call.1} parent=1 // pred_check_branch
      %41 = sbr.rel (0) target = $region21
    $region20: #{tpu_custom_call.1} parent=1 // pred_region
      %42 = dma.done [#allocation6], 1024
    $region21: #{tpu_custom_call.1} parent=1 // pred_fallthru
      _
    %v44 = vld [vmem:[#allocation2] sm:$0xf]
    %v45 = vld [vmem:[#allocation2 + $0x4] sm:$0xf]
    %v46 = vld [vmem:[#allocation5] sm:$0xf]
    %v47 = vld [vmem:[#allocation5 + $0x4] sm:$0xf]
    %v48 = vld [vmem:[#allocation5 + $0x8] sm:$0xf]
    %v49 = vld [vmem:[#allocation5 + $0xc] sm:$0xf]
    %v50 = vld [vmem:[#allocation5 + $0x10] sm:$0xf]
    %v51 = vld [vmem:[#allocation5 + $0x14] sm:$0xf]
    %v52 = vld [vmem:[#allocation5 + $0x18] sm:$0xf]
    %v53 = vld [vmem:[#allocation5 + $0x1c] sm:$0xf]
    %v54 = vld [vmem:[#allocation5 + $0x20] sm:$0xf]
    %v55 = vld [vmem:[#allocation5 + $0x24] sm:$0xf]
    %v56 = vld [vmem:[#allocation5 + $0x28] sm:$0xf]
    %v57 = vld [vmem:[#allocation5 + $0x2c] sm:$0xf]
    %v58 = vld [vmem:[#allocation5 + $0x30] sm:$0xf]
    %v59 = vld [vmem:[#allocation5 + $0x34] sm:$0xf]
    %v60 = vld [vmem:[#allocation5 + $0x38] sm:$0xf]
    %v61 = vld [vmem:[#allocation5 + $0x3c] sm:$0xf]
    %v64 = vunpack.c.l.b16 %v44
    %v65 = vunpack.c.l.b16 %v45
    %v66 = vpack.c.b16 %v65, %v64
    %v84 = vunpack.c.l.b16 %v46
    %v85 = vunpack.c.l.b16 %v47
    %v86 = vunpack.c.l.b16 %v48
    %v87 = vunpack.c.l.b16 %v49
    %v88 = vunpack.c.l.b16 %v50
    %v89 = vunpack.c.l.b16 %v51
    %v90 = vunpack.c.l.b16 %v52
    %v91 = vunpack.c.l.b16 %v53
    %v92 = vunpack.c.l.b16 %v54
    %v93 = vunpack.c.l.b16 %v55
    %v94 = vunpack.c.l.b16 %v56
    %v95 = vunpack.c.l.b16 %v57
    %v96 = vunpack.c.l.b16 %v58
    %v97 = vunpack.c.l.b16 %v59
    %v98 = vunpack.c.l.b16 %v60
    %v99 = vunpack.c.l.b16 %v61
    %v100 = vpack.c.b16 %v85, %v84
    %v101 = vpack.c.b16 %v87, %v86
    %v102 = vpack.c.b16 %v89, %v88
    %v103 = vpack.c.b16 %v91, %v90
    %v104 = vpack.c.b16 %v93, %v92
    %v105 = vpack.c.b16 %v95, %v94
    %v106 = vpack.c.b16 %v97, %v96
    %v107 = vpack.c.b16 %v99, %v98
    %116 = vmatprep.subr.bf16.mxu0 0
    %117 = vmatpush1.bf16.msra.mxu0 %v100
    %118 = vmatprep.subr.bf16.mxu0 0
    %119 = vmatpush1.bf16.msra.mxu0 %v101
    %120 = vmatprep.subr.bf16.mxu0 0
    %121 = vmatpush1.bf16.msra.mxu0 %v102
    %122 = vmatprep.subr.bf16.mxu0 0
    %123 = vmatpush1.bf16.msra.mxu0 %v103
    %124 = vmatprep.subr.bf16.mxu0 0
    %125 = vmatpush1.bf16.msra.mxu0 %v104
    %126 = vmatprep.subr.bf16.mxu0 0
    %127 = vmatpush1.bf16.msra.mxu0 %v105
    %128 = vmatprep.subr.bf16.mxu0 0
    %129 = vmatpush1.bf16.msra.mxu0 %v106
    %130 = vmatprep.subr.bf16.mxu0 0
    %131 = vmatpush1.bf16.msra.mxu0 %v107
    %132 = vmatprep.subr.bf16.mxu0 0
    %133 = vmatpush1.bf16.msra.mxu0 0
    %134 = vmatprep.subr.bf16.mxu0 0
    %135 = vmatpush1.bf16.msra.mxu0 0
    %136 = vmatprep.subr.bf16.mxu0 0
    %137 = vmatpush1.bf16.msra.mxu0 0
    %138 = vmatprep.subr.bf16.mxu0 0
    %139 = vmatpush1.bf16.msra.mxu0 0
    %140 = vmatprep.subr.bf16.mxu0 0
    %141 = vmatpush1.bf16.msra.mxu0 0
    %142 = vmatprep.subr.bf16.mxu0 0
    %143 = vmatpush1.bf16.msra.mxu0 0
    %144 = vmatprep.subr.bf16.mxu0 0
    %145 = vmatpush1.bf16.msra.mxu0 0
    %146 = vmatprep.subr.bf16.mxu0 0
    %147 = vmatpush1.bf16.msra.mxu0 0
    %148 = vmatprep.mubr.bf16.mxu0 0
    %149 = vmatmul.mubr.bf16.gmra.mrb[0].mxu0 %v66
    %v150 = vpop.f32.mrb[0].mxu0
    %v151 = vadd.f32 0.0, %v150
    %v152 = vpop.f32.mrb[0].mxu0
    %v153 = vpop.f32.mrb[0].mxu0
    %v154 = vadd.f32 0.0, %v153
    %v155 = vpop.f32.mrb[0].mxu0
    %156 = vdwg.mxu0
    %p157 = scmp.eq.s32.totalorder 0, 0
    // Predicated region
    $region22: #{tpu_custom_call.1} parent=1 // pred_check
      %p158 = pneg %p157
    $region23: #{tpu_custom_call.1} parent=1 // pred_check_branch
      %160 = sbr.rel (%p158) target = $region25
    $region24: #{tpu_custom_call.1} parent=1 // pred_region
      %v161 = vld [vmem:[%s2] sm:$0x1]
      %v163 = vlaneseq
      %v164 = vshrl.u32 %v163, 7
      %v165 = vsub.s32 0, %v164
      %v166 = vrot.slane %v161, %v165
      %v168 = vadd.f32 %v166, %v151
      %v169 = vadd.f32 %v166, %v154
      %170 = vst [vmem:[#allocation7] sm:$0xff] %v168
      %171 = vst [vmem:[#allocation7 + $0x8] sm:$0xff] %v169
    $region25: #{tpu_custom_call.1} parent=1 // pred_fallthru
      _
    %p172 = scmp.gt.s32.totalorder 0, 0
    // Predicated region
    $region26: #{tpu_custom_call.1} parent=1 // pred_check
      %p173 = pneg %p172
    $region27: #{tpu_custom_call.1} parent=1 // pred_check_branch
      %175 = sbr.rel (%p173) target = $region29
    $region28: #{tpu_custom_call.1} parent=1 // pred_region
      %v176 = vld [vmem:[#allocation7] sm:$0xff]
      %v177 = vld [vmem:[#allocation7 + $0x8] sm:$0xff]
      %v178 = vadd.f32 %v176, %v151
      %v179 = vadd.f32 %v177, %v154
      %180 = vst [vmem:[#allocation7] sm:$0xff] %v178
      %181 = vst [vmem:[#allocation7 + $0x8] sm:$0xff] %v179
    $region29: #{tpu_custom_call.1} parent=1 // pred_fallthru
      _
    // Predicated region
    $region30: #{tpu_custom_call.1} parent=1 // pred_check
      %p182 = pneg %p157
    $region31: #{tpu_custom_call.1} parent=1 // pred_check_branch
      %184 = sbr.rel (%p182) target = $region33
    $region32: #{tpu_custom_call.1} parent=1 // pred_region
      %v185 = vld [vmem:[#allocation7] sm:$0xff]
      %v186 = vld [vmem:[#allocation7 + $0x8] sm:$0xff]
      %v187 = vmax.f32 %v185, 0.0
      %v188 = vmax.f32 %v186, 0.0
      %189 = vst [vmem:[#allocation7] sm:$0xff] %v187
      %190 = vst [vmem:[#allocation7 + $0x8] sm:$0xff] %v188
    $region33: #{tpu_custom_call.1} parent=1 // pred_fallthru
      _
    // Predicated region
    $region34: #{tpu_custom_call.1} parent=1 // pred_check
      _
    $region35: #{tpu_custom_call.1} parent=1 // pred_check_branch
      %192 = sbr.rel (0) target = $region37
    $region36: #{tpu_custom_call.1} parent=1 // pred_region
      %s194 = ssub.s32 256, 256
      %195 = vsyncadd [#allocation4], %s194
      %s196 = sshll.u32 [#allocation7], 4
      %s197 = int_to_ptr.vmem [resolvable:$true] %s196
      %202 = dma.vmem_to_hbm [thread:$0]  %s197, 256, %s3, [#allocation4], 128, 128, 8
    $region37: #{tpu_custom_call.1} parent=1 // pred_fallthru
      _
    // Predicated region
    $region38: #{tpu_custom_call.1} parent=1 // pred_check
      _
    $region39: #{tpu_custom_call.1} parent=1 // pred_check_branch
      %204 = sbr.rel (0) target = $region41
    $region40: #{tpu_custom_call.1} parent=1 // pred_region
      %205 = dma.done [#allocation4], 256
    $region41: #{tpu_custom_call.1} parent=1 // pred_fallthru
      _
    %206 = vsyncpa [#allocation3], 1
    %207 = vsyncpa [#allocation6], 1
    %208 = vsyncpa [#allocation4], 1

</llo_original>
